<compile_context>
chip_gen: v6e
topology: v6e:2x2x1
jax: 0.10.0
libtpu: 0.0.40
codegen_flags: <defaults>
</compile_context>

<pallas_src>
import jax
import jax.numpy as jnp
from jax import lax
from jax.experimental import pallas as pl
from jax.experimental.pallas import tpu as pltpu

_EPS = 1e-12  # F.normalize default eps


def _round_up(v, m):
    return ((v + m - 1) // m) * m


def _vmem_budget():
    """Per-generation (vmem_limit_bytes, tile_budget_bytes)."""
    cap = 64 * 1024 * 1024                      # conservative fallback (v7x per-TC)
    try:
        cap = int(pltpu.get_tpu_info().vmem_capacity_bytes)
    except Exception:
        pass
    return (cap * 3) // 4, cap // 2             # 96/64 MiB on v5e/v6e, 48/32 MiB on v7x


def _choose_tile_n(n, in_dim, out_blk, x_itemsize, *, budget):
    """Largest N-tile fitting the budget (double-buffered x/out tiles + f32
    working set), aligned to MXU-friendly sizes."""
    per_row = 2 * in_dim * x_itemsize + out_blk * (2 * x_itemsize + 4) + 16
    tn = budget // max(per_row, 1)
    tn = int(max(min(tn, 1024), 8))             # >=512 already near the HBM roofline
    if tn >= n:
        return n                                # single tile == full dim (legal)
    if tn >= 128:
        return (tn // 128) * 128                # MXU-pass aligned
    return (tn // 8) * 8                        # sublane aligned


def _fwd_kernel(x_ref, w_ref, o_ref):
    # Row-wise L2 normalization folded into a post-matmul scale:
    #   (x / max(||x||, eps)) @ W^T == (x @ W^T) * rsqrt(max(||x||^2, eps^2))
    # NOTE: rows of a ragged last N-tile hold undefined VMEM contents; they only
    # produce garbage OUTPUT rows, which Pallas clips on the bounded writeback.
    # Do NOT add any cross-row reduction here without masking those rows.
    x = x_ref[...]
    sq = jnp.sum(jnp.square(x.astype(jnp.float32)), axis=-1, keepdims=True)
    inv = lax.rsqrt(jnp.maximum(sq, _EPS * _EPS))            # (tile_n, 1) f32
    out = lax.dot_general(
        x.astype(w_ref.dtype), w_ref[...],                   # contract in_dim; no transpose
        dimension_numbers=(((1,), (1,)), ((), ())),
        preferred_element_type=jnp.float32)
    o_ref[...] = (out * inv).astype(o_ref.dtype)


def linear_head_pcc(x: jax.Array, weight: jax.Array, inference: bool = True,
                    *, tile_n: int | None = None,
                    tile_out: int | None = None) -> jax.Array:
    """x: (N, in_dim), weight: (out_dim, in_dim)  ->  (N, out_dim)."""
    n, in_dim = x.shape
    out_dim, in_dim_w = weight.shape
    assert in_dim == in_dim_w

    vmem_limit, tile_budget = _vmem_budget()

    # Conditional lane padding (only when nearly free): for small heads the
    # unmasked-vst win never pays back 8x output HBM traffic + a wrapper slice.
    # Hot-path callers should hoist this pad (it is a full weight copy).
    out_dim_p = _round_up(out_dim, 128)
    pad = out_dim_p - out_dim
    if pad > 0 and pad * 4 > out_dim_p:          # pad fraction > 25% -> skip padding
        out_dim_p, pad = out_dim, 0
    w = weight if pad == 0 else jnp.pad(weight, ((0, pad), (0, 0)))

    x_itemsize = x.dtype.itemsize
    w_itemsize = w.dtype.itemsize

    # Weight residency: keep the whole (out_dim_p, in_dim) weight in VMEM when
    # it fits half the tile budget; otherwise tile out_dim in 128-multiples.
    if tile_out is None:
        if out_dim_p * in_dim * w_itemsize <= tile_budget // 2:
            tile_out = out_dim_p
        else:
            tile_out = ((tile_budget // 4) // (in_dim * w_itemsize)) // 128 * 128
            tile_out = max(min(tile_out, out_dim_p), 128)
    tile_out = min(tile_out, out_dim_p)
    weight_resident = tile_out >= out_dim_p

    w_vmem = (1 if weight_resident else 2) * tile_out * in_dim * w_itemsize
    if tile_n is None:
        tile_n = _choose_tile_n(n, in_dim, tile_out, x_itemsize,
                                budget=max(tile_budget - w_vmem, 2 * 1024 * 1024))
    tile_n = max(min(tile_n, n), 1)
    grid_n = pl.cdiv(n, tile_n)

    def call(weight_pipeline_mode):
        if weight_resident:
            grid = (grid_n,)
            w_kwargs = ({} if weight_pipeline_mode is None
                        else {"pipeline_mode": weight_pipeline_mode})
            in_specs = [
                pl.BlockSpec((tile_n, in_dim), lambda i: (i, 0)),          # x: pipelined
                pl.BlockSpec((tile_out, in_dim), lambda i: (0, 0), **w_kwargs),  # W: resident
            ]
            out_specs = pl.BlockSpec((tile_n, out_dim_p), lambda i: (i, 0))
            semantics = ("parallel",)
        else:
            # Weight-chunk axis (j) outermost, N (i) innermost: each weight
            # chunk is DMA'd from HBM exactly once; x tiles re-stream per chunk.
            grid = (pl.cdiv(out_dim_p, tile_out), grid_n)
            in_specs = [
                pl.BlockSpec((tile_n, in_dim), lambda j, i: (i, 0)),
                pl.BlockSpec((tile_out, in_dim), lambda j, i: (j, 0)),
            ]
            out_specs = pl.BlockSpec((tile_n, tile_out), lambda j, i: (i, j))
            semantics = ("parallel", "parallel")
        return pl.pallas_call(
            _fwd_kernel,
            out_shape=jax.ShapeDtypeStruct((n, out_dim_p), x.dtype),
            grid_spec=pltpu.PrefetchScalarGridSpec(
                num_scalar_prefetch=0, grid=grid,
                in_specs=in_specs, out_specs=out_specs),
            compiler_params=pltpu.CompilerParams(
                dimension_semantics=semantics,
                vmem_limit_bytes=vmem_limit),
        )(x, w)

    if weight_resident:
        try:
            out_p = call(pl.Buffered(1))   # constant index_map: 2nd buffer is pure waste
        except Exception:
            out_p = call(None)             # graceful fallback to default double-buffering
    else:
        out_p = call(None)

    out = out_p if out_dim_p == out_dim else out_p[:, :out_dim]

    if not inference:
        # Exact batch-mean correction by linearity, computed in f32:
        #   (xn - mean_N(xn)) @ W^T == xn @ W^T - mean_N(xn @ W^T)
        correction = jnp.mean(out.astype(jnp.float32), axis=0, keepdims=True)
        out = (out.astype(jnp.float32) - correction).astype(out.dtype)
    return out


def _reference(x, weight, inference=True):
    xn = x / jnp.maximum(jnp.linalg.norm(x, axis=-1, keepdims=True), _EPS)
    if not inference:
        xn = xn - jnp.mean(xn, axis=0, keepdims=True)
    return xn @ weight.T


# TODO(synk): normalize_prototypes() is a no-grad weight-update utility, not part
# of the forward pass; it is not translated here.

if __name__ == "__main__":
    key = jax.random.PRNGKey(0)
    k_x, k_w, k_x2, k_w2 = jax.random.split(key, 4)

    # Small shapes consistent with the head: batch=8, in_dim=32, out_dim=16.
    batch, in_dim, out_dim = 8, 32, 16
    x = jax.random.normal(k_x, (batch, in_dim), dtype=jnp.float32)
    bound = 1.0 / (in_dim ** 0.5)
    weight = jax.random.uniform(k_w, (out_dim, in_dim), dtype=jnp.float32,
                                minval=-bound, maxval=bound)

    # inference=True path (module default).
    out = jax.block_until_ready(linear_head_pcc(x, weight, inference=True))
    ref = _reference(x, weight, inference=True)
    assert out.shape == (batch, out_dim)
    assert jnp.allclose(out, ref, atol=1e-5, rtol=1e-5)

    # inference=False path (batch-mean correction via f32 mean-of-output).
    out_t = jax.block_until_ready(linear_head_pcc(x, weight, inference=False))
    ref_t = _reference(x, weight, inference=False)
    assert jnp.allclose(out_t, ref_t, atol=1e-5, rtol=1e-5)

    # Multi-tile + ragged-last-tile path: N=40, TN=16 -> grid=3 (last tile 8 rows).
    n2 = 40
    x2 = jax.random.normal(k_x2, (n2, in_dim), dtype=jnp.float32)
    out2 = jax.block_until_ready(linear_head_pcc(x2, weight, inference=True, tile_n=16))
    assert jnp.allclose(out2, _reference(x2, weight, True), atol=1e-5, rtol=1e-5)
    out2_t = jax.block_until_ready(linear_head_pcc(x2, weight, inference=False, tile_n=16))
    assert jnp.allclose(out2_t, _reference(x2, weight, False), atol=1e-5, rtol=1e-5)

    # Non-resident-weight path (2D grid, out_dim tiled): out_dim=256, tile_out=128.
    out_dim3 = 256
    weight3 = jax.random.uniform(k_w2, (out_dim3, in_dim), dtype=jnp.float32,
                                 minval=-bound, maxval=bound)
    out3 = jax.block_until_ready(
        linear_head_pcc(x2, weight3, inference=True, tile_n=16, tile_out=128))
    assert out3.shape == (n2, out_dim3)
    assert jnp.allclose(out3, _reference(x2, weight3, True), atol=1e-5, rtol=1e-5)

    print("KERNEL_OK")
</pallas_src>

<mosaic_0001>
module attributes {stable_mosaic.version = 11 : i64} {
  func.func @_fwd_kernel(%arg0: i32, %arg1: memref<8x32xf32, #tpu.memory_space<vmem>>, %arg2: memref<16x32xf32, #tpu.memory_space<vmem>>, %arg3: memref<8x16xf32, #tpu.memory_space<vmem>>) attributes {dimension_semantics = [#tpu.dimension_semantics<parallel>], iteration_bounds = array<i64: 1>, scalar_prefetch = 0 : i64, scratch_operands = 0 : i64, tpu.core_type = #tpu.core_type<tc>, window_params = [{transform_indices = @transform_0, window_bounds = array<i64: 8, 32>}, {pipeline_mode = #tpu.pipeline_mode<synchronous>, transform_indices = @transform_1, window_bounds = array<i64: 16, 32>}, {transform_indices = @transform_2, window_bounds = array<i64: 8, 16>}]} {
    %c0 = arith.constant 0 : index
    %c0_0 = arith.constant 0 : index
    %0 = vector.load %arg1[%c0, %c0_0] : memref<8x32xf32, #tpu.memory_space<vmem>>, vector<8x32xf32>
    %1 = arith.mulf %0, %0 : vector<8x32xf32>
    %cst = arith.constant dense<0.000000e+00> : vector<8xf32>
    %2 = vector.multi_reduction <add>, %1, %cst [1] : vector<8x32xf32> to vector<8xf32>
    %3 = vector.shape_cast %2 : vector<8xf32> to vector<8x1xf32>
    %cst_1 = arith.constant 1.000000e-24 : f32
    %4 = vector.broadcast %cst_1 : f32 to vector<8x1xf32>
    %5 = arith.maximumf %3, %4 : vector<8x1xf32>
    %6 = math.rsqrt %5 : vector<8x1xf32>
    %c0_2 = arith.constant 0 : index
    %c0_3 = arith.constant 0 : index
    %7 = vector.load %arg2[%c0_2, %c0_3] : memref<16x32xf32, #tpu.memory_space<vmem>>, vector<16x32xf32>
    %cst_4 = arith.constant dense<0.000000e+00> : vector<8x16xf32>
    %8 = tpu.matmul %0, %7, %cst_4 {dimension_numbers = #tpu.dot_dimension_numbers<[1], [1], [0], [0], [0, 0, 1, 0], [], []>} : vector<8x32xf32>, vector<16x32xf32>, vector<8x16xf32> -> vector<8x16xf32>
    %9 = vector.broadcast %6 : vector<8x1xf32> to vector<8x16xf32>
    %10 = arith.mulf %8, %9 : vector<8x16xf32>
    %c0_5 = arith.constant 0 : index
    %c0_6 = arith.constant 0 : index
    %11 = vector.load %arg3[%c0_5, %c0_6] : memref<8x16xf32, #tpu.memory_space<vmem>>, vector<8x16xf32>
    tpu.vector_store %arg3[%c0_5, %c0_6], %10 {strides = array<i32>} : memref<8x16xf32, #tpu.memory_space<vmem>>, vector<8x16xf32>,
    return
  }
  func.func @transform_0(%arg0: i32) -> (i32, i32) {
    %c0_i32 = arith.constant 0 : i32
    %c0_i32_0 = arith.constant 0 : i32
    return %arg0, %c0_i32 : i32, i32
  }
  func.func @transform_1(%arg0: i32) -> (i32, i32) {
    %c0_i32 = arith.constant 0 : i32
    %c0_i32_0 = arith.constant 0 : i32
    %c0_i32_1 = arith.constant 0 : i32
    return %c0_i32, %c0_i32_0 : i32, i32
  }
  func.func @transform_2(%arg0: i32) -> (i32, i32) {
    %c0_i32 = arith.constant 0 : i32
    %c0_i32_0 = arith.constant 0 : i32
    return %arg0, %c0_i32 : i32, i32
  }
}

module attributes {stable_mosaic.version = 11 : i64} {
  func.func @_fwd_kernel(%arg0: i32, %arg1: memref<8x32xf32, #tpu.memory_space<vmem>>, %arg2: memref<16x32xf32, #tpu.memory_space<vmem>>, %arg3: memref<8x16xf32, #tpu.memory_space<vmem>>) attributes {dimension_semantics = [#tpu.dimension_semantics<parallel>], iteration_bounds = array<i64: 1>, scalar_prefetch = 0 : i64, scratch_operands = 0 : i64, tpu.core_type = #tpu.core_type<tc>, window_params = [{transform_indices = @transform_0, window_bounds = array<i64: 8, 32>}, {pipeline_mode = #tpu.pipeline_mode<synchronous>, transform_indices = @transform_1, window_bounds = array<i64: 16, 32>}, {transform_indices = @transform_2, window_bounds = array<i64: 8, 16>}]} {
    %c0 = arith.constant 0 : index
    %c0_0 = arith.constant 0 : index
    %0 = vector.load %arg1[%c0, %c0_0] : memref<8x32xf32, #tpu.memory_space<vmem>>, vector<8x32xf32>
    %1 = arith.mulf %0, %0 : vector<8x32xf32>
    %cst = arith.constant dense<0.000000e+00> : vector<8xf32>
    %2 = vector.multi_reduction <add>, %1, %cst [1] : vector<8x32xf32> to vector<8xf32>
    %3 = vector.shape_cast %2 : vector<8xf32> to vector<8x1xf32>
    %cst_1 = arith.constant 1.000000e-24 : f32
    %4 = vector.broadcast %cst_1 : f32 to vector<8x1xf32>
    %5 = arith.maximumf %3, %4 : vector<8x1xf32>
    %6 = math.rsqrt %5 : vector<8x1xf32>
    %c0_2 = arith.constant 0 : index
    %c0_3 = arith.constant 0 : index
    %7 = vector.load %arg2[%c0_2, %c0_3] : memref<16x32xf32, #tpu.memory_space<vmem>>, vector<16x32xf32>
    %cst_4 = arith.constant dense<0.000000e+00> : vector<8x16xf32>
    %8 = tpu.matmul %0, %7, %cst_4 {dimension_numbers = #tpu.dot_dimension_numbers<[1], [1], [0], [0], [0, 0, 1, 0], [], []>} : vector<8x32xf32>, vector<16x32xf32>, vector<8x16xf32> -> vector<8x16xf32>
    %9 = vector.broadcast %6 : vector<8x1xf32> to vector<8x16xf32>
    %10 = arith.mulf %8, %9 : vector<8x16xf32>
    %c0_5 = arith.constant 0 : index
    %c0_6 = arith.constant 0 : index
    %11 = vector.load %arg3[%c0_5, %c0_6] : memref<8x16xf32, #tpu.memory_space<vmem>>, vector<8x16xf32>
    tpu.vector_store %arg3[%c0_5, %c0_6], %10 {strides = array<i32>} : memref<8x16xf32, #tpu.memory_space<vmem>>, vector<8x16xf32>,
    return
  }
  func.func @transform_0(%arg0: i32) -> (i32, i32) {
    %c0_i32 = arith.constant 0 : i32
    %c0_i32_0 = arith.constant 0 : i32
    return %arg0, %c0_i32 : i32, i32
  }
  func.func @transform_1(%arg0: i32) -> (i32, i32) {
    %c0_i32 = arith.constant 0 : i32
    %c0_i32_0 = arith.constant 0 : i32
    %c0_i32_1 = arith.constant 0 : i32
    return %c0_i32, %c0_i32_0 : i32, i32
  }
  func.func @transform_2(%arg0: i32) -> (i32, i32) {
    %c0_i32 = arith.constant 0 : i32
    %c0_i32_0 = arith.constant 0 : i32
    return %arg0, %c0_i32 : i32, i32
  }
}

</mosaic_0001>

<llo_original>
// kernel: tpu_custom_call.1
$region0: #{tpu_custom_call.1}
  #allocation0 [shape = 'u32[]', space=smem, size = 0x4, offset = 0x4, fixed_abs, tag = 'smem constant byte address 0x4 - core index']
  #allocation1 [shape = 'u32[144,128]{1,0:T(1,128)}', space=vmem, size = 0x12000, scoped, tag = 'internal scratch']
  %s0 = inlined_call_operand.hbm [shape: f32[8,32], index: 0, kind: input, shape index: {}]
  %s1 = inlined_call_operand.hbm [shape: f32[16,32], index: 1, kind: input, shape index: {}]
  %s2 = inlined_call_operand.hbm [shape: f32[8,16], index: 2, kind: output, shape index: {}]
  %s3 = sld [smem:[#allocation0]]
  $region26: #{tpu_custom_call.1} parent=0
    _
  %s5 = ssub.s32 1, %s3
  %s6 = scalar_select 0, %s5, %s3
  $region1: #{tpu_custom_call.1} parent=0
    #allocation2 [shape = 'u8[4096]{0}', space=vmem, size = 0x1000, scoped, tag = 'input window, operand 0, single buffered']
    #allocation3 [shape = 's32[1]{0}', space=sflag, size = 0x4, scoped, tag = 'scoped memory for tpu_custom_call.1']
    #allocation4 [shape = 's32[1]{0}', space=sflag, size = 0x4, scoped, tag = 'scoped memory for tpu_custom_call.1']
    #allocation5 [shape = 'u8[8192]{0}', space=vmem, size = 0x2000, scoped, tag = 'input window, operand 1, single buffered']
    #allocation6 [shape = 's32[1]{0}', space=sflag, size = 0x4, scoped, tag = 'scoped memory for tpu_custom_call.1']
    #allocation7 [shape = 'u8[4096]{0}', space=vmem, size = 0x1000, scoped, tag = 'output window, operand 0, single buffered']
    %7 = vsyncpa [#allocation3], 0
    %8 = vsyncpa [#allocation6], 0
    %9 = vsyncpa [#allocation4], 0
    // Predicated region
    $region2: #{tpu_custom_call.1} parent=1 // pred_check
      _
    $region3: #{tpu_custom_call.1} parent=1 // pred_check_branch
      %11 = sbr.rel (0) target = $region5
    $region4: #{tpu_custom_call.1} parent=1 // pred_region
      %s13 = ssub.s32 128, 128
      %14 = vsyncadd [#allocation3], %s13
      %s16 = sshll.u32 [#allocation2], 4
      %s17 = int_to_ptr.vmem [resolvable:$true] %s16
      %19 = dma.hbm_to_vmem [thread:$0]  %s0, 128, %s17, [#allocation3]
    $region5: #{tpu_custom_call.1} parent=1 // pred_fallthru
      _
    // Predicated region
    $region6: #{tpu_custom_call.1} parent=1 // pred_check
      _
    $region7: #{tpu_custom_call.1} parent=1 // pred_check_branch
      %21 = sbr.rel (0) target = $region9
    $region8: #{tpu_custom_call.1} parent=1 // pred_region
      %s23 = ssub.s32 256, 256
      %24 = vsyncadd [#allocation6], %s23
      %s25 = sshll.u32 [#allocation5], 4
      %s26 = int_to_ptr.vmem [resolvable:$true] %s25
      %31 = dma.hbm_to_vmem [thread:$0]  %s1, 256, %s26, [#allocation6], 128, 128, 8
    $region9: #{tpu_custom_call.1} parent=1 // pred_fallthru
      _
    // Predicated region
    $region10: #{tpu_custom_call.1} parent=1 // pred_check
      _
    $region11: #{tpu_custom_call.1} parent=1 // pred_check_branch
      %33 = sbr.rel (0) target = $region13
    $region12: #{tpu_custom_call.1} parent=1 // pred_region
      %34 = dma.done [#allocation3], 128
    $region13: #{tpu_custom_call.1} parent=1 // pred_fallthru
      _
    // Predicated region
    $region14: #{tpu_custom_call.1} parent=1 // pred_check
      _
    $region15: #{tpu_custom_call.1} parent=1 // pred_check_branch
      %36 = sbr.rel (0) target = $region17
    $region16: #{tpu_custom_call.1} parent=1 // pred_region
      %37 = dma.done [#allocation6], 256
    $region17: #{tpu_custom_call.1} parent=1 // pred_fallthru
      _
    %v38 = vld [vmem:[#allocation2] sm:$0xff]
    %v39 = vmul.f32 %v38, %v38
    %vm40 = vcmask 261120
    %v41 = vsel %vm40, %v39, 0.0
    %42 = vadd.xlane.f32.xlu0 %v41
    %v43 = vpop.xlane.xlu0 %42
    %v44 = vmax.f32 %v43, 1e-24
    %v45 = vrsqrt.pop %v44
    %v46 = vld [vmem:[#allocation5] sm:$0xff]
    %v47 = vld [vmem:[#allocation5 + $0x8] sm:$0xff]
    %v49 = vsel %vm40, %v38, 0
    %v52 = vsel %vm40, %v46, 0
    %v55 = vsel %vm40, %v47, 0
    %57 = vmatprep.subr.mxu0 0.0
    %58 = vmatpush1.xpose.msra.mxu0 0.0
    %59 = vmatprep.subr.mxu0 0.0
    %60 = vmatpush1.xpose.msra.mxu0 0.0
    %61 = vmatprep.subr.mxu0 0.0
    %62 = vmatpush1.xpose.msra.mxu0 0.0
    %63 = vmatprep.subr.mxu0 0.0
    %64 = vmatpush1.xpose.msra.mxu0 0.0
    %65 = vmatprep.subr.mxu0 0.0
    %66 = vmatpush1.xpose.msra.mxu0 0.0
    %67 = vmatprep.subr.mxu0 0.0
    %68 = vmatpush1.xpose.msra.mxu0 0.0
    %69 = vmatprep.subr.mxu0 0.0
    %70 = vmatpush1.xpose.msra.mxu0 0.0
    %71 = vmatprep.subr.mxu0 0.0
    %72 = vmatpush1.xpose.msra.mxu0 0.0
    %73 = vmatprep.subr.mxu0 0.0
    %74 = vmatpush1.xpose.msra.mxu0 0.0
    %75 = vmatprep.subr.mxu0 0.0
    %76 = vmatpush1.xpose.msra.mxu0 0.0
    %77 = vmatprep.subr.mxu0 0.0
    %78 = vmatpush1.xpose.msra.mxu0 0.0
    %79 = vmatprep.subr.mxu0 0.0
    %80 = vmatpush1.xpose.msra.mxu0 0.0
    %81 = vmatprep.subr.mxu0 0.0
    %82 = vmatpush1.xpose.msra.mxu0 0.0
    %83 = vmatprep.subr.mxu0 0.0
    %84 = vmatpush1.xpose.msra.mxu0 0.0
    %85 = vmatprep.subr.mxu0 0.0
    %86 = vmatpush1.xpose.msra.mxu0 %v55
    %87 = vmatprep.subr.mxu0 0.0
    %88 = vmatpush1.xpose.msra.mxu0 %v52
    %89 = vmatprep.subr.mxu0 0.0
    %90 = vmatpush2.xpose.msra.mxu0 0.0
    %91 = vmatprep.subr.mxu0 0.0
    %92 = vmatpush2.xpose.msra.mxu0 0.0
    %93 = vmatprep.subr.mxu0 0.0
    %94 = vmatpush2.xpose.msra.mxu0 0.0
    %95 = vmatprep.subr.mxu0 0.0
    %96 = vmatpush2.xpose.msra.mxu0 0.0
    %97 = vmatprep.subr.mxu0 0.0
    %98 = vmatpush2.xpose.msra.mxu0 0.0
    %99 = vmatprep.subr.mxu0 0.0
    %100 = vmatpush2.xpose.msra.mxu0 0.0
    %101 = vmatprep.subr.mxu0 0.0
    %102 = vmatpush2.xpose.msra.mxu0 0.0
    %103 = vmatprep.subr.mxu0 0.0
    %104 = vmatpush2.xpose.msra.mxu0 0.0
    %105 = vmatprep.subr.mxu0 0.0
    %106 = vmatpush2.xpose.msra.mxu0 0.0
    %107 = vmatprep.subr.mxu0 0.0
    %108 = vmatpush2.xpose.msra.mxu0 0.0
    %109 = vmatprep.subr.mxu0 0.0
    %110 = vmatpush2.xpose.msra.mxu0 0.0
    %111 = vmatprep.subr.mxu0 0.0
    %112 = vmatpush2.xpose.msra.mxu0 0.0
    %113 = vmatprep.subr.mxu0 0.0
    %114 = vmatpush2.xpose.msra.mxu0 0.0
    %115 = vmatprep.subr.mxu0 0.0
    %116 = vmatpush2.xpose.msra.mxu0 0.0
    %117 = vmatprep.subr.mxu0 0.0
    %118 = vmatpush2.xpose.msra.mxu0 0.0
    %119 = vmatprep.subr.mxu0 0.0
    %120 = vmatpush2.xpose.msra.mxu0 0.0
    %121 = vmatprep.mubr.f32.mxu0 0.0
    %122 = vmatmul.mubr.f32.gmra.mxu0 %v49
    %v123 = vpop.f32.mrf.mxu0
    %v124 = vadd.f32 0.0, %v123
    %v125 = vpop.f32.mrf.mxu0
    %126 = vdwg.mxu0
    %v127 = vmul.f32 %v124, %v45
    %vm128 = vcmask 130048
    %129 = vst.msk [vmem:[#allocation7] sm:$0xff] %vm128, %v127
    // Predicated region
    $region18: #{tpu_custom_call.1} parent=1 // pred_check
      _
    $region19: #{tpu_custom_call.1} parent=1 // pred_check_branch
      %131 = sbr.rel (0) target = $region21
    $region20: #{tpu_custom_call.1} parent=1 // pred_region
      %s133 = ssub.s32 128, 128
      %134 = vsyncadd [#allocation4], %s133
      %s136 = sshll.u32 [#allocation7], 4
      %s137 = int_to_ptr.vmem [resolvable:$true] %s136
      %139 = dma.vmem_to_hbm [thread:$0]  %s137, 128, %s2, [#allocation4]
    $region21: #{tpu_custom_call.1} parent=1 // pred_fallthru
      _
    // Predicated region
    $region22: #{tpu_custom_call.1} parent=1 // pred_check
      _
    $region23: #{tpu_custom_call.1} parent=1 // pred_check_branch
      %141 = sbr.rel (0) target = $region25
    $region24: #{tpu_custom_call.1} parent=1 // pred_region
      %142 = dma.done [#allocation4], 128
    $region25: #{tpu_custom_call.1} parent=1 // pred_fallthru
      _
    %143 = vsyncpa [#allocation3], 1
    %144 = vsyncpa [#allocation6], 1
    %145 = vsyncpa [#allocation4], 1

// kernel: tpu_custom_call.1
$region0: #{tpu_custom_call.1}
  #allocation0 [shape = 'u32[]', space=smem, size = 0x4, offset = 0x4, fixed_abs, tag = 'smem constant byte address 0x4 - core index']
  #allocation1 [shape = 'u32[144,128]{1,0:T(1,128)}', space=vmem, size = 0x12000, scoped, tag = 'internal scratch']
  %s0 = inlined_call_operand.hbm [shape: f32[8,32], index: 0, kind: input, shape index: {}]
  %s1 = inlined_call_operand.hbm [shape: f32[16,32], index: 1, kind: input, shape index: {}]
  %s2 = inlined_call_operand.hbm [shape: f32[8,16], index: 2, kind: output, shape index: {}]
  %s3 = sld [smem:[#allocation0]]
  $region26: #{tpu_custom_call.1} parent=0
    _
  %s5 = ssub.s32 1, %s3
  %s6 = scalar_select 0, %s5, %s3
  $region1: #{tpu_custom_call.1} parent=0
    #allocation2 [shape = 'u8[4096]{0}', space=vmem, size = 0x1000, scoped, tag = 'input window, operand 0, single buffered']
    #allocation3 [shape = 's32[1]{0}', space=sflag, size = 0x4, scoped, tag = 'scoped memory for tpu_custom_call.1']
    #allocation4 [shape = 's32[1]{0}', space=sflag, size = 0x4, scoped, tag = 'scoped memory for tpu_custom_call.1']
    #allocation5 [shape = 'u8[8192]{0}', space=vmem, size = 0x2000, scoped, tag = 'input window, operand 1, single buffered']
    #allocation6 [shape = 's32[1]{0}', space=sflag, size = 0x4, scoped, tag = 'scoped memory for tpu_custom_call.1']
    #allocation7 [shape = 'u8[4096]{0}', space=vmem, size = 0x1000, scoped, tag = 'output window, operand 0, single buffered']
    %7 = vsyncpa [#allocation3], 0
    %8 = vsyncpa [#allocation6], 0
    %9 = vsyncpa [#allocation4], 0
    // Predicated region
    $region2: #{tpu_custom_call.1} parent=1 // pred_check
      _
    $region3: #{tpu_custom_call.1} parent=1 // pred_check_branch
      %11 = sbr.rel (0) target = $region5
    $region4: #{tpu_custom_call.1} parent=1 // pred_region
      %s13 = ssub.s32 128, 128
      %14 = vsyncadd [#allocation3], %s13
      %s16 = sshll.u32 [#allocation2], 4
      %s17 = int_to_ptr.vmem [resolvable:$true] %s16
      %19 = dma.hbm_to_vmem [thread:$0]  %s0, 128, %s17, [#allocation3]
    $region5: #{tpu_custom_call.1} parent=1 // pred_fallthru
      _
    // Predicated region
    $region6: #{tpu_custom_call.1} parent=1 // pred_check
      _
    $region7: #{tpu_custom_call.1} parent=1 // pred_check_branch
      %21 = sbr.rel (0) target = $region9
    $region8: #{tpu_custom_call.1} parent=1 // pred_region
      %s23 = ssub.s32 256, 256
      %24 = vsyncadd [#allocation6], %s23
      %s25 = sshll.u32 [#allocation5], 4
      %s26 = int_to_ptr.vmem [resolvable:$true] %s25
      %31 = dma.hbm_to_vmem [thread:$0]  %s1, 256, %s26, [#allocation6], 128, 128, 8
    $region9: #{tpu_custom_call.1} parent=1 // pred_fallthru
      _
    // Predicated region
    $region10: #{tpu_custom_call.1} parent=1 // pred_check
      _
    $region11: #{tpu_custom_call.1} parent=1 // pred_check_branch
      %33 = sbr.rel (0) target = $region13
    $region12: #{tpu_custom_call.1} parent=1 // pred_region
      %34 = dma.done [#allocation3], 128
    $region13: #{tpu_custom_call.1} parent=1 // pred_fallthru
      _
    // Predicated region
    $region14: #{tpu_custom_call.1} parent=1 // pred_check
      _
    $region15: #{tpu_custom_call.1} parent=1 // pred_check_branch
      %36 = sbr.rel (0) target = $region17
    $region16: #{tpu_custom_call.1} parent=1 // pred_region
      %37 = dma.done [#allocation6], 256
    $region17: #{tpu_custom_call.1} parent=1 // pred_fallthru
      _
    %v38 = vld [vmem:[#allocation2] sm:$0xff]
    %v39 = vmul.f32 %v38, %v38
    %vm40 = vcmask 261120
    %v41 = vsel %vm40, %v39, 0.0
    %42 = vadd.xlane.f32.xlu0 %v41
    %v43 = vpop.xlane.xlu0 %42
    %v44 = vmax.f32 %v43, 1e-24
    %v45 = vrsqrt.pop %v44
    %v46 = vld [vmem:[#allocation5] sm:$0xff]
    %v47 = vld [vmem:[#allocation5 + $0x8] sm:$0xff]
    %v49 = vsel %vm40, %v38, 0
    %v52 = vsel %vm40, %v46, 0
    %v55 = vsel %vm40, %v47, 0
    %57 = vmatprep.subr.mxu0 0.0
    %58 = vmatpush1.xpose.msra.mxu0 0.0
    %59 = vmatprep.subr.mxu0 0.0
    %60 = vmatpush1.xpose.msra.mxu0 0.0
    %61 = vmatprep.subr.mxu0 0.0
    %62 = vmatpush1.xpose.msra.mxu0 0.0
    %63 = vmatprep.subr.mxu0 0.0
    %64 = vmatpush1.xpose.msra.mxu0 0.0
    %65 = vmatprep.subr.mxu0 0.0
    %66 = vmatpush1.xpose.msra.mxu0 0.0
    %67 = vmatprep.subr.mxu0 0.0
    %68 = vmatpush1.xpose.msra.mxu0 0.0
    %69 = vmatprep.subr.mxu0 0.0
    %70 = vmatpush1.xpose.msra.mxu0 0.0
    %71 = vmatprep.subr.mxu0 0.0
    %72 = vmatpush1.xpose.msra.mxu0 0.0
    %73 = vmatprep.subr.mxu0 0.0
    %74 = vmatpush1.xpose.msra.mxu0 0.0
    %75 = vmatprep.subr.mxu0 0.0
    %76 = vmatpush1.xpose.msra.mxu0 0.0
    %77 = vmatprep.subr.mxu0 0.0
    %78 = vmatpush1.xpose.msra.mxu0 0.0
    %79 = vmatprep.subr.mxu0 0.0
    %80 = vmatpush1.xpose.msra.mxu0 0.0
    %81 = vmatprep.subr.mxu0 0.0
    %82 = vmatpush1.xpose.msra.mxu0 0.0
    %83 = vmatprep.subr.mxu0 0.0
    %84 = vmatpush1.xpose.msra.mxu0 0.0
    %85 = vmatprep.subr.mxu0 0.0
    %86 = vmatpush1.xpose.msra.mxu0 %v55
    %87 = vmatprep.subr.mxu0 0.0
    %88 = vmatpush1.xpose.msra.mxu0 %v52
    %89 = vmatprep.subr.mxu0 0.0
    %90 = vmatpush2.xpose.msra.mxu0 0.0
    %91 = vmatprep.subr.mxu0 0.0
    %92 = vmatpush2.xpose.msra.mxu0 0.0
    %93 = vmatprep.subr.mxu0 0.0
    %94 = vmatpush2.xpose.msra.mxu0 0.0
    %95 = vmatprep.subr.mxu0 0.0
    %96 = vmatpush2.xpose.msra.mxu0 0.0
    %97 = vmatprep.subr.mxu0 0.0
    %98 = vmatpush2.xpose.msra.mxu0 0.0
    %99 = vmatprep.subr.mxu0 0.0
    %100 = vmatpush2.xpose.msra.mxu0 0.0
    %101 = vmatprep.subr.mxu0 0.0
    %102 = vmatpush2.xpose.msra.mxu0 0.0
    %103 = vmatprep.subr.mxu0 0.0
    %104 = vmatpush2.xpose.msra.mxu0 0.0
    %105 = vmatprep.subr.mxu0 0.0
    %106 = vmatpush2.xpose.msra.mxu0 0.0
    %107 = vmatprep.subr.mxu0 0.0
    %108 = vmatpush2.xpose.msra.mxu0 0.0
    %109 = vmatprep.subr.mxu0 0.0
    %110 = vmatpush2.xpose.msra.mxu0 0.0
    %111 = vmatprep.subr.mxu0 0.0
    %112 = vmatpush2.xpose.msra.mxu0 0.0
    %113 = vmatprep.subr.mxu0 0.0
    %114 = vmatpush2.xpose.msra.mxu0 0.0
    %115 = vmatprep.subr.mxu0 0.0
    %116 = vmatpush2.xpose.msra.mxu0 0.0
    %117 = vmatprep.subr.mxu0 0.0
    %118 = vmatpush2.xpose.msra.mxu0 0.0
    %119 = vmatprep.subr.mxu0 0.0
    %120 = vmatpush2.xpose.msra.mxu0 0.0
    %121 = vmatprep.mubr.f32.mxu0 0.0
    %122 = vmatmul.mubr.f32.gmra.mxu0 %v49
    %v123 = vpop.f32.mrf.mxu0
    %v124 = vadd.f32 0.0, %v123
    %v125 = vpop.f32.mrf.mxu0
    %126 = vdwg.mxu0
    %v127 = vmul.f32 %v124, %v45
    %vm128 = vcmask 130048
    %129 = vst.msk [vmem:[#allocation7] sm:$0xff] %vm128, %v127
    // Predicated region
    $region18: #{tpu_custom_call.1} parent=1 // pred_check
      _
    $region19: #{tpu_custom_call.1} parent=1 // pred_check_branch
      %131 = sbr.rel (0) target = $region21
    $region20: #{tpu_custom_call.1} parent=1 // pred_region
      %s133 = ssub.s32 128, 128
      %134 = vsyncadd [#allocation4], %s133
      %s136 = sshll.u32 [#allocation7], 4
      %s137 = int_to_ptr.vmem [resolvable:$true] %s136
      %139 = dma.vmem_to_hbm [thread:$0]  %s137, 128, %s2, [#allocation4]
    $region21: #{tpu_custom_call.1} parent=1 // pred_fallthru
      _
    // Predicated region
    $region22: #{tpu_custom_call.1} parent=1 // pred_check
      _
    $region23: #{tpu_custom_call.1} parent=1 // pred_check_branch
      %141 = sbr.rel (0) target = $region25
    $region24: #{tpu_custom_call.1} parent=1 // pred_region
      %142 = dma.done [#allocation4], 128
    $region25: #{tpu_custom_call.1} parent=1 // pred_fallthru
      _
    %143 = vsyncpa [#allocation3], 1
    %144 = vsyncpa [#allocation6], 1
    %145 = vsyncpa [#allocation4], 1

</llo_original>
